<compile_context>
chip_gen: v7x
topology: tpu7x:2x2x1
jax: 0.10.0
libtpu: 0.0.40
codegen_flags: <defaults>
</compile_context>

<pallas_src>
import numpy as np
import jax
import jax.numpy as jnp
from jax.experimental import pallas as pl
from jax.experimental.pallas import tpu as pltpu


# --------------------------------------------------------------------------
# per-generation knobs (review: 96+ MiB / bigger tiles on v5e/v6e, ~48 MiB on
# v7x whose VMEM is only 64 MiB)
# --------------------------------------------------------------------------
def _vmem_capacity_bytes():
    try:
        return int(pltpu.get_tpu_info().vmem_capacity_bytes)
    except Exception:
        return 64 * 1024 * 1024          # conservative (v7x-sized) fallback


_VMEM_CAP = _vmem_capacity_bytes()
_VMEM_LIMIT = min(int(0.75 * _VMEM_CAP), 100 * 1024 * 1024)
_MAX_ROW_TILE = 512 if _VMEM_CAP >= 96 * 1024 * 1024 else 256


def _pick_tile(n, align, max_tile):
    """Largest tile <= max_tile that divides n and is a multiple of `align`;
    falls back to the full extent."""
    if n <= max_tile:
        return n
    t = (max_tile // align) * align
    while t >= align:
        if n % t == 0:
            return t
        t -= align
    return n


def _head_row_tile(h, wp):
    """Row tile for the flow head: must divide h and keep the flattened
    (tr*(w+2)) output lane block 128-aligned; otherwise whole-image fallback.
    TODO(synk): ragged-tile support for heights like 540 (1080p) on v7x."""
    cap = min(_MAX_ROW_TILE, 128)
    if h <= cap:
        return h
    t = (cap // 8) * 8
    while t >= 8:
        if h % t == 0 and (t * wp) % 128 == 0:
            return t
        t -= 8
    return h


# --------------------------------------------------------------------------
# host-side (numpy) resize-matrix builders — exact-2x structure only
# --------------------------------------------------------------------------
def _bilinear_matrix(out_size, in_size):
    """Interp matrix M (out,in) reproducing F.interpolate(mode='bilinear',
    align_corners=False) along one axis: y = M @ x."""
    scale = in_size / out_size
    d = np.arange(out_size, dtype=np.float64)
    src = np.clip((d + 0.5) * scale - 0.5, 0.0, in_size - 1.0)
    i0 = np.floor(src).astype(np.int64)
    i1 = np.minimum(i0 + 1, in_size - 1)
    frac = (src - i0).astype(np.float32)
    m = np.zeros((out_size, in_size), dtype=np.float32)
    m[np.arange(out_size), i0] += 1.0 - frac
    m[np.arange(out_size), i1] += frac
    return m


def _down_col_matrix(W, w):
    """(W, w+2): exact-2x column pair-average with the row 0.5 and the /255
    normalisation folded in; columns 0 and w+1 stay zero so the downsample
    output is already zero-padded along x for the 3x3 conv head."""
    m = np.zeros((W, w + 2), np.float32)
    j = np.arange(w)
    m[2 * j, j + 1] = 0.25 / 255.0
    m[2 * j + 1, j + 1] = 0.25 / 255.0
    return m


def _up_row_blocks(H, h, TH):
    """Banded per-tile slices of the exact-2x row-upsample matrix:
    (n_tiles, TH, KB).  Row tile i only touches input rows
    [i*TH//2 - 1, i*TH//2 + TH//2], so K shrinks from h to TH//2+8."""
    rup = _bilinear_matrix(H, h)
    n = H // TH
    KB = min(h, TH // 2 + 8)
    blocks = np.zeros((n, TH, KB), np.float32)
    for i in range(n):
        koff = int(np.clip(i * (TH // 2) - 4, 0, h - KB))   # must match kernel
        blocks[i] = rup[i * TH:(i + 1) * TH, koff:koff + KB]
    # safety: no band weight may fall outside the sliced window
    assert np.allclose(blocks.sum(axis=-1), 1.0, atol=1e-5)
    return blocks


# --------------------------------------------------------------------------
# stage 1: normalize + exact 0.5x bilinear downsample of both images + concat
# --------------------------------------------------------------------------
def _downsample_kernel(i0_ref, i1_ref, cdn_ref, o_ref):
    # i0/i1: (3, th, 2W) f32  planar tiles with vertical pixel pairs folded
    #        into lanes -> the 2x row average is a contiguous lane-slice add.
    # cdn:   (W, w+2) exact-2x column matrix (0.25/255 taps, zero pad columns)
    # o:     (6, th, w+2) f32  concat(img0, img1) planes, x zero-padded
    Wfull = i0_ref.shape[2] // 2
    x0 = i0_ref[...]
    x1 = i1_ref[...]
    s0 = x0[:, :, :Wfull] + x0[:, :, Wfull:]
    s1 = x1[:, :, :Wfull] + x1[:, :, Wfull:]
    cdn = cdn_ref[...]
    for c in range(3):                                   # static unroll
        o_ref[c] = jnp.dot(s0[c], cdn, preferred_element_type=jnp.float32)
        o_ref[3 + c] = jnp.dot(s1[c], cdn, preferred_element_type=jnp.float32)


def downsample_pair(img0_p, img1_p, cdn, h, w):
    th = _pick_tile(h, 8, _MAX_ROW_TILE)
    W2 = img0_p.shape[2]
    return pl.pallas_call(
        _downsample_kernel,
        out_shape=jax.ShapeDtypeStruct((6, h, w + 2), jnp.float32),
        grid=(h // th,),
        in_specs=[
            pl.BlockSpec((3, th, W2), lambda i: (0, i, 0)),
            pl.BlockSpec((3, th, W2), lambda i: (0, i, 0)),
            pl.BlockSpec(cdn.shape, lambda i: (0, 0),
                         pipeline_mode=pl.Buffered(1)),       # grid-invariant
        ],
        out_specs=pl.BlockSpec((6, th, w + 2), lambda i: (0, i, 0)),
        compiler_params=pltpu.CompilerParams(
            dimension_semantics=("parallel",),
            vmem_limit_bytes=_VMEM_LIMIT),
    )(img0_p, img1_p, cdn)


# --------------------------------------------------------------------------
# stage 2: fused, row-tiled 3-layer 3x3-conv flow head (IFNet stand-in)
# --------------------------------------------------------------------------
def flow_head(x6p_flat, w1, b1, w2, b2, w3, b3, *, h, w, hidden):
    # x6p_flat: (6, (h+6)*(w+2)) f32 in HBM — zero-padded (3 rows top/bottom,
    # 1 col left/right) half-res planes with spatial dims pre-flattened so any
    # row window is a single contiguous lane slice (one rectangular DMA).
    wp = w + 2
    tr = _head_row_tile(h, wp)
    n_tiles = h // tr
    cmax = max(hidden, 6)
    NP = (tr + 6) * wp          # layer-1 input lanes per tile (3-row halo)
    NPF = NP + wp               # slack: junk-column taps may read 2 lanes past
    NA = (tr + 4) * wp          # largest per-layer output (layer 1)

    layer_cfg = (
        (0, 6, hidden, tr + 6, True),
        (1, hidden, hidden, tr + 4, True),
        (2, hidden, 5, tr + 2, False),
    )

    def kernel(x6p_hbm, w1_ref, b1_ref, w2_ref, b2_ref, w3_ref, b3_ref,
               o_ref, xstage, pf, acc, sem):
        i = pl.program_id(0)
        # ---- manual halo DMA: padded rows [i*tr, i*tr + tr + 6) ------------
        start = i * tr * wp
        cp = pltpu.make_async_copy(x6p_hbm.at[:, pl.ds(start, NP)],
                                   xstage, sem.at[0])
        cp.start()
        cp.wait()
        pf[0:6, 0:NP] = xstage[...].astype(jnp.bfloat16)
        pf[:, 0:1] = jnp.zeros((cmax, 1), jnp.bfloat16)   # left pad of row 0

        wrefs = (w1_ref, w2_ref, w3_ref)
        brefs = (b1_ref, b2_ref, b3_ref)
        out = None
        for li, cin, cout, r_in, relu in layer_cfg:
            r_out = r_in - 2
            n_out = r_out * wp
            wl, bl = wrefs[li], brefs[li]
            # 9 per-tap matmuls accumulated in f32 VMEM (no im2col tensor)
            first = True
            for ky in range(3):
                for kx in range(3):
                    off = ky * wp + kx
                    contrib = jnp.dot(wl[3 * ky + kx],
                                      pf[0:cin, off:off + n_out],
                                      preferred_element_type=jnp.float32)
                    if first:
                        acc[0:cout, 0:n_out] = contrib
                        first = False
                    else:
                        acc[0:cout, 0:n_out] += contrib
            a = acc[0:cout, 0:n_out] + bl[...]
            if relu:
                a = jnp.maximum(a, 0.0)
            if li < 2:
                # re-pad columns for the next layer: zero the 2 junk lanes per
                # row and shift by +1 so real pixels land at columns 1..w.
                col = jax.lax.broadcasted_iota(jnp.int32, (1, n_out), 1) % wp
                a = jnp.where(col < w, a, 0.0)
                pf[0:cout, 1:1 + n_out] = a.astype(jnp.bfloat16)
            else:
                out = a
        o_ref[...] = out

    return pl.pallas_call(
        kernel,
        out_shape=jax.ShapeDtypeStruct((5, h * wp), jnp.float32),
        grid=(n_tiles,),
        in_specs=[
            pl.BlockSpec(memory_space=pl.ANY),            # x6p stays in HBM
            pl.BlockSpec(w1.shape, lambda i: (0, 0, 0),
                         pipeline_mode=pl.Buffered(1)),
            pl.BlockSpec(b1.shape, lambda i: (0, 0),
                         pipeline_mode=pl.Buffered(1)),
            pl.BlockSpec(w2.shape, lambda i: (0, 0, 0),
                         pipeline_mode=pl.Buffered(1)),
            pl.BlockSpec(b2.shape, lambda i: (0, 0),
                         pipeline_mode=pl.Buffered(1)),
            pl.BlockSpec(w3.shape, lambda i: (0, 0, 0),
                         pipeline_mode=pl.Buffered(1)),
            pl.BlockSpec(b3.shape, lambda i: (0, 0),
                         pipeline_mode=pl.Buffered(1)),
        ],
        out_specs=pl.BlockSpec((5, tr * wp), lambda i: (0, i)),
        scratch_shapes=[
            pltpu.VMEM((6, NP), jnp.float32),        # DMA staging (f32)
            pltpu.VMEM((cmax, NPF), jnp.bfloat16),   # lane-flat padded acts
            pltpu.VMEM((cmax, NA), jnp.float32),     # f32 conv accumulator
            pltpu.SemaphoreType.DMA((1,)),
        ],
        compiler_params=pltpu.CompilerParams(
            dimension_semantics=("parallel",),
            vmem_limit_bytes=_VMEM_LIMIT),
    )(x6p_flat, w1, b1, w2, b2, w3, b3)


# --------------------------------------------------------------------------
# stage 3: sigmoid-mask merge + exact 2x upsample + clamp*255 + uint8 store
# --------------------------------------------------------------------------
def _merge_upsample_kernel(mask_ref, w0_ref, w1_ref, rupb_ref, cup_ref, o_ref):
    # mask: (h, w)            flow-head mask logits       [grid-invariant]
    # w0/w1: (1, h, w)        one warped channel plane    [changes per c]
    # rupb: (1, TH, KB)       banded exact-2x row block for this row tile
    # cup:  (w, W)            exact-2x column matrix      [grid-invariant]
    # o:    (1, TH, W) uint8  planar output tile
    i = pl.program_id(1)
    TH = o_ref.shape[1]
    h = mask_ref.shape[0]
    KB = rupb_ref.shape[2]
    # same window formula as the host-side _up_row_blocks slicing
    koff = jnp.clip(i * (TH // 2) - 4, 0, h - KB)
    # merge only the rows this tile actually needs (no full-plane recompute)
    m = jax.nn.sigmoid(mask_ref[pl.ds(koff, KB), :])
    a0 = w0_ref[0, pl.ds(koff, KB), :]
    a1 = w1_ref[0, pl.ds(koff, KB), :]
    merged = a0 * m + a1 * (1.0 - m)                       # (KB, w)
    t = jnp.dot(rupb_ref[0], merged, preferred_element_type=jnp.float32)
    up = jnp.dot(t, cup_ref[...], preferred_element_type=jnp.float32)
    o_ref[0] = (jnp.clip(up, 0.0, 1.0) * 255.0).astype(jnp.uint8)


def merge_upsample(w0, w1, mask, rupb, cup, *, H, W):
    h, w = mask.shape
    TH = rupb.shape[1]
    return pl.pallas_call(
        _merge_upsample_kernel,
        out_shape=jax.ShapeDtypeStruct((3, H, W), jnp.uint8),
        grid=(3, H // TH),
        in_specs=[
            pl.BlockSpec((h, w), lambda c, i: (0, 0),
                         pipeline_mode=pl.Buffered(1)),
            pl.BlockSpec((1, h, w), lambda c, i: (c, 0, 0)),
            pl.BlockSpec((1, h, w), lambda c, i: (c, 0, 0)),
            pl.BlockSpec((1, TH, rupb.shape[2]), lambda c, i: (i, 0, 0)),
            pl.BlockSpec((w, W), lambda c, i: (0, 0),
                         pipeline_mode=pl.Buffered(1)),
        ],
        out_specs=pl.BlockSpec((1, TH, W), lambda c, i: (c, i, 0)),
        compiler_params=pltpu.CompilerParams(
            dimension_semantics=("parallel", "parallel"),
            vmem_limit_bytes=_VMEM_LIMIT),
    )(mask, w0, w1, rupb, cup)


# --------------------------------------------------------------------------
# plain-JAX glue: backward warp (grid_sample bilinear, border clamp)
# --------------------------------------------------------------------------
def warp_bilinear(img_chw, flow_2hw):
    _, h, w = img_chw.shape
    yy, xx = jnp.meshgrid(jnp.arange(h, dtype=jnp.float32),
                          jnp.arange(w, dtype=jnp.float32), indexing="ij")
    sx = jnp.clip(xx + flow_2hw[0], 0.0, w - 1.0)
    sy = jnp.clip(yy + flow_2hw[1], 0.0, h - 1.0)
    x0 = jnp.floor(sx)
    y0 = jnp.floor(sy)
    fx = (sx - x0)[None]
    fy = (sy - y0)[None]
    x0i = x0.astype(jnp.int32)
    y0i = y0.astype(jnp.int32)
    x1i = jnp.minimum(x0i + 1, w - 1)
    y1i = jnp.minimum(y0i + 1, h - 1)
    v00 = img_chw[:, y0i, x0i]
    v01 = img_chw[:, y0i, x1i]
    v10 = img_chw[:, y1i, x0i]
    v11 = img_chw[:, y1i, x1i]
    return (v00 * (1 - fx) * (1 - fy) + v01 * fx * (1 - fy)
            + v10 * (1 - fx) * fy + v11 * fx * fy)


# --------------------------------------------------------------------------
# RIFE forward (Pallas version)
# --------------------------------------------------------------------------
class RIFEPallas:
    def __init__(self, key, hidden=16):
        k1, k2, k3 = jax.random.split(key, 3)

        def init_conv(k, cin, cout, scale):
            wk = jax.random.normal(k, (3, 3, cin, cout), jnp.float32)
            wk = wk * (scale / np.sqrt(9.0 * cin))
            # per-tap layout (9, cout, cin): tap t is a ready-to-use matmul LHS
            wt = jnp.transpose(wk, (0, 1, 3, 2)).reshape(9, cout, cin)
            return wt.astype(jnp.bfloat16), jnp.zeros((cout, 1), jnp.float32)

        self.hidden = hidden
        self.w1, self.b1 = init_conv(k1, 6, hidden, 1.0)
        self.w2, self.b2 = init_conv(k2, hidden, hidden, 1.0)
        self.w3, self.b3 = init_conv(k3, hidden, 5, 0.5)

    def __call__(self, img0_hwc, img1_hwc):
        H, W, _ = img0_hwc.shape
        assert H % 2 == 0 and W % 2 == 0
        h, w = H // 2, W // 2

        cdn = jnp.asarray(_down_col_matrix(W, w))
        TH = _pick_tile(H, 32, _MAX_ROW_TILE)      # 32-row floor for uint8
        rupb = jnp.asarray(_up_row_blocks(H, h, TH))
        cup = jnp.asarray(_bilinear_matrix(W, w).T)

        # HWC -> planar CHW (same layout pass as torch .permute), then fold
        # vertical pixel pairs into lanes: free row-major reshape.
        img0_p = jnp.transpose(img0_hwc.astype(jnp.float32),
                               (2, 0, 1)).reshape(3, h, 2 * W)
        img1_p = jnp.transpose(img1_hwc.astype(jnp.float32),
                               (2, 0, 1)).reshape(3, h, 2 * W)

        # 1) fused normalise + exact 0.5x bilinear downsample + channel concat
        x6 = downsample_pair(img0_p, img1_p, cdn, h, w)      # (6, h, w+2)

        # 2) fused, row-tiled 3-layer conv flow head (manual halo DMA)
        x6p = jnp.pad(x6, ((0, 0), (3, 3), (0, 0)))          # 3-row halo pad
        x6p_flat = x6p.reshape(6, (h + 6) * (w + 2))         # free reshape
        f5 = flow_head(x6p_flat, self.w1, self.b1, self.w2, self.b2,
                       self.w3, self.b3, h=h, w=w, hidden=self.hidden)
        f5 = f5.reshape(5, h, w + 2)                         # free reshape
        flow0 = f5[0:2, :, 0:w]
        flow1 = f5[2:4, :, 0:w]
        mask_logit = f5[4, :, 0:w]

        # 3) backward warp (plain JAX gather on small half-res planes)
        d0 = x6[0:3, :, 1:w + 1]
        d1 = x6[3:6, :, 1:w + 1]
        warped0 = warp_bilinear(d0, flow0)
        warped1 = warp_bilinear(d1, flow1)

        # 4) sigmoid-mask merge + exact 2x upsample + clamp*255 + uint8
        out_p = merge_upsample(warped0, warped1, mask_logit, rupb, cup,
                               H=H, W=W)                     # (3, H, W) u8
        return jnp.transpose(out_p, (1, 2, 0))               # (H, W, 3) u8


if __name__ == "__main__":
    key = jax.random.PRNGKey(0)
    k_img0, k_img1, k_params = jax.random.split(key, 3)

    H, W = 16, 16
    img0 = jax.random.uniform(k_img0, (H, W, 3), jnp.float32, 0.0, 255.0)
    img1 = jax.random.uniform(k_img1, (H, W, 3), jnp.float32, 0.0, 255.0)

    model = RIFEPallas(k_params, hidden=16)
    out = model(img0, img1)
    out = jax.block_until_ready(out)

    assert out.shape == (H, W, 3), out.shape
    assert out.dtype == jnp.uint8, out.dtype
    print("KERNEL_OK")
</pallas_src>

<mosaic_0001>
module attributes {stable_mosaic.version = 11 : i64} {
  func.func @_downsample_kernel(%arg0: i32, %arg1: memref<3x8x32xf32, #tpu.memory_space<vmem>>, %arg2: memref<3x8x32xf32, #tpu.memory_space<vmem>>, %arg3: memref<16x10xf32, #tpu.memory_space<vmem>>, %arg4: memref<6x8x10xf32, #tpu.memory_space<vmem>>) attributes {dimension_semantics = [#tpu.dimension_semantics<parallel>], iteration_bounds = array<i64: 1>, scalar_prefetch = 0 : i64, scratch_operands = 0 : i64, tpu.core_type = #tpu.core_type<tc>, window_params = [{transform_indices = @transform_0, window_bounds = array<i64: 3, 8, 32>}, {transform_indices = @transform_1, window_bounds = array<i64: 3, 8, 32>}, {pipeline_mode = #tpu.pipeline_mode<synchronous>, transform_indices = @transform_2, window_bounds = array<i64: 16, 10>}, {transform_indices = @transform_3, window_bounds = array<i64: 6, 8, 10>}]} {
    %c0 = arith.constant 0 : index
    %c0_0 = arith.constant 0 : index
    %c0_1 = arith.constant 0 : index
    %0 = vector.load %arg1[%c0, %c0_0, %c0_1] : memref<3x8x32xf32, #tpu.memory_space<vmem>>, vector<3x8x32xf32>
    %c0_2 = arith.constant 0 : index
    %c0_3 = arith.constant 0 : index
    %c0_4 = arith.constant 0 : index
    %1 = vector.load %arg2[%c0_2, %c0_3, %c0_4] : memref<3x8x32xf32, #tpu.memory_space<vmem>>, vector<3x8x32xf32>
    %2 = vector.extract_strided_slice %0 {offsets = [0, 0, 0], sizes = [3, 8, 16], strides = [1, 1, 1]} : vector<3x8x32xf32> to vector<3x8x16xf32>
    %3 = vector.extract_strided_slice %0 {offsets = [0, 0, 16], sizes = [3, 8, 16], strides = [1, 1, 1]} : vector<3x8x32xf32> to vector<3x8x16xf32>
    %4 = arith.addf %2, %3 : vector<3x8x16xf32>
    %5 = vector.extract_strided_slice %1 {offsets = [0, 0, 0], sizes = [3, 8, 16], strides = [1, 1, 1]} : vector<3x8x32xf32> to vector<3x8x16xf32>
    %6 = vector.extract_strided_slice %1 {offsets = [0, 0, 16], sizes = [3, 8, 16], strides = [1, 1, 1]} : vector<3x8x32xf32> to vector<3x8x16xf32>
    %7 = arith.addf %5, %6 : vector<3x8x16xf32>
    %c0_5 = arith.constant 0 : index
    %c0_6 = arith.constant 0 : index
    %8 = vector.load %arg3[%c0_5, %c0_6] : memref<16x10xf32, #tpu.memory_space<vmem>>, vector<16x10xf32>
    %9 = vector.extract_strided_slice %4 {offsets = [0, 0, 0], sizes = [1, 8, 16], strides = [1, 1, 1]} : vector<3x8x16xf32> to vector<1x8x16xf32>
    %10 = vector.shape_cast %9 : vector<1x8x16xf32> to vector<8x16xf32>
    %cst = arith.constant dense<0.000000e+00> : vector<8x10xf32>
    %11 = tpu.matmul %10, %8, %cst {dimension_numbers = #tpu.dot_dimension_numbers<[1], [0], [0], [1], [0, 0, 1, 1], [], []>} : vector<8x16xf32>, vector<16x10xf32>, vector<8x10xf32> -> vector<8x10xf32>
    %c0_7 = arith.constant 0 : index
    %c0_8 = arith.constant 0 : index
    %c0_9 = arith.constant 0 : index
    %12 = vector.load %arg4[%c0_7, %c0_8, %c0_9] : memref<6x8x10xf32, #tpu.memory_space<vmem>>, vector<1x8x10xf32>
    %13 = vector.shape_cast %12 : vector<1x8x10xf32> to vector<8x10xf32>
    %14 = vector.shape_cast %11 : vector<8x10xf32> to vector<1x8x10xf32>
    tpu.vector_store %arg4[%c0_7, %c0_8, %c0_9], %14 {strides = array<i32>} : memref<6x8x10xf32, #tpu.memory_space<vmem>>, vector<1x8x10xf32>,
    %15 = vector.extract_strided_slice %7 {offsets = [0, 0, 0], sizes = [1, 8, 16], strides = [1, 1, 1]} : vector<3x8x16xf32> to vector<1x8x16xf32>
    %16 = vector.shape_cast %15 : vector<1x8x16xf32> to vector<8x16xf32>
    %cst_10 = arith.constant dense<0.000000e+00> : vector<8x10xf32>
    %17 = tpu.matmul %16, %8, %cst_10 {dimension_numbers = #tpu.dot_dimension_numbers<[1], [0], [0], [1], [0, 0, 1, 1], [], []>} : vector<8x16xf32>, vector<16x10xf32>, vector<8x10xf32> -> vector<8x10xf32>
    %c3 = arith.constant 3 : index
    %c0_11 = arith.constant 0 : index
    %c0_12 = arith.constant 0 : index
    %18 = vector.load %arg4[%c3, %c0_11, %c0_12] : memref<6x8x10xf32, #tpu.memory_space<vmem>>, vector<1x8x10xf32>
    %19 = vector.shape_cast %18 : vector<1x8x10xf32> to vector<8x10xf32>
    %20 = vector.shape_cast %17 : vector<8x10xf32> to vector<1x8x10xf32>
    tpu.vector_store %arg4[%c3, %c0_11, %c0_12], %20 {strides = array<i32>} : memref<6x8x10xf32, #tpu.memory_space<vmem>>, vector<1x8x10xf32>,
    %21 = vector.extract_strided_slice %4 {offsets = [1, 0, 0], sizes = [1, 8, 16], strides = [1, 1, 1]} : vector<3x8x16xf32> to vector<1x8x16xf32>
    %22 = vector.shape_cast %21 : vector<1x8x16xf32> to vector<8x16xf32>
    %cst_13 = arith.constant dense<0.000000e+00> : vector<8x10xf32>
    %23 = tpu.matmul %22, %8, %cst_13 {dimension_numbers = #tpu.dot_dimension_numbers<[1], [0], [0], [1], [0, 0, 1, 1], [], []>} : vector<8x16xf32>, vector<16x10xf32>, vector<8x10xf32> -> vector<8x10xf32>
    %c1 = arith.constant 1 : index
    %c0_14 = arith.constant 0 : index
    %c0_15 = arith.constant 0 : index
    %24 = vector.load %arg4[%c1, %c0_14, %c0_15] : memref<6x8x10xf32, #tpu.memory_space<vmem>>, vector<1x8x10xf32>
    %25 = vector.shape_cast %24 : vector<1x8x10xf32> to vector<8x10xf32>
    %26 = vector.shape_cast %23 : vector<8x10xf32> to vector<1x8x10xf32>
    tpu.vector_store %arg4[%c1, %c0_14, %c0_15], %26 {strides = array<i32>} : memref<6x8x10xf32, #tpu.memory_space<vmem>>, vector<1x8x10xf32>,
    %27 = vector.extract_strided_slice %7 {offsets = [1, 0, 0], sizes = [1, 8, 16], strides = [1, 1, 1]} : vector<3x8x16xf32> to vector<1x8x16xf32>
    %28 = vector.shape_cast %27 : vector<1x8x16xf32> to vector<8x16xf32>
    %cst_16 = arith.constant dense<0.000000e+00> : vector<8x10xf32>
    %29 = tpu.matmul %28, %8, %cst_16 {dimension_numbers = #tpu.dot_dimension_numbers<[1], [0], [0], [1], [0, 0, 1, 1], [], []>} : vector<8x16xf32>, vector<16x10xf32>, vector<8x10xf32> -> vector<8x10xf32>
    %c4 = arith.constant 4 : index
    %c0_17 = arith.constant 0 : index
    %c0_18 = arith.constant 0 : index
    %30 = vector.load %arg4[%c4, %c0_17, %c0_18] : memref<6x8x10xf32, #tpu.memory_space<vmem>>, vector<1x8x10xf32>
    %31 = vector.shape_cast %30 : vector<1x8x10xf32> to vector<8x10xf32>
    %32 = vector.shape_cast %29 : vector<8x10xf32> to vector<1x8x10xf32>
    tpu.vector_store %arg4[%c4, %c0_17, %c0_18], %32 {strides = array<i32>} : memref<6x8x10xf32, #tpu.memory_space<vmem>>, vector<1x8x10xf32>,
    %33 = vector.extract_strided_slice %4 {offsets = [2, 0, 0], sizes = [1, 8, 16], strides = [1, 1, 1]} : vector<3x8x16xf32> to vector<1x8x16xf32>
    %34 = vector.shape_cast %33 : vector<1x8x16xf32> to vector<8x16xf32>
    %cst_19 = arith.constant dense<0.000000e+00> : vector<8x10xf32>
    %35 = tpu.matmul %34, %8, %cst_19 {dimension_numbers = #tpu.dot_dimension_numbers<[1], [0], [0], [1], [0, 0, 1, 1], [], []>} : vector<8x16xf32>, vector<16x10xf32>, vector<8x10xf32> -> vector<8x10xf32>
    %c2 = arith.constant 2 : index
    %c0_20 = arith.constant 0 : index
    %c0_21 = arith.constant 0 : index
    %36 = vector.load %arg4[%c2, %c0_20, %c0_21] : memref<6x8x10xf32, #tpu.memory_space<vmem>>, vector<1x8x10xf32>
    %37 = vector.shape_cast %36 : vector<1x8x10xf32> to vector<8x10xf32>
    %38 = vector.shape_cast %35 : vector<8x10xf32> to vector<1x8x10xf32>
    tpu.vector_store %arg4[%c2, %c0_20, %c0_21], %38 {strides = array<i32>} : memref<6x8x10xf32, #tpu.memory_space<vmem>>, vector<1x8x10xf32>,
    %39 = vector.extract_strided_slice %7 {offsets = [2, 0, 0], sizes = [1, 8, 16], strides = [1, 1, 1]} : vector<3x8x16xf32> to vector<1x8x16xf32>
    %40 = vector.shape_cast %39 : vector<1x8x16xf32> to vector<8x16xf32>
    %cst_22 = arith.constant dense<0.000000e+00> : vector<8x10xf32>
    %41 = tpu.matmul %40, %8, %cst_22 {dimension_numbers = #tpu.dot_dimension_numbers<[1], [0], [0], [1], [0, 0, 1, 1], [], []>} : vector<8x16xf32>, vector<16x10xf32>, vector<8x10xf32> -> vector<8x10xf32>
    %c5 = arith.constant 5 : index
    %c0_23 = arith.constant 0 : index
    %c0_24 = arith.constant 0 : index
    %42 = vector.load %arg4[%c5, %c0_23, %c0_24] : memref<6x8x10xf32, #tpu.memory_space<vmem>>, vector<1x8x10xf32>
    %43 = vector.shape_cast %42 : vector<1x8x10xf32> to vector<8x10xf32>
    %44 = vector.shape_cast %41 : vector<8x10xf32> to vector<1x8x10xf32>
    tpu.vector_store %arg4[%c5, %c0_23, %c0_24], %44 {strides = array<i32>} : memref<6x8x10xf32, #tpu.memory_space<vmem>>, vector<1x8x10xf32>,
    return
  }
  func.func @transform_0(%arg0: i32) -> (i32, i32, i32) {
    %c0_i32 = arith.constant 0 : i32
    %c0_i32_0 = arith.constant 0 : i32
    %c0_i32_1 = arith.constant 0 : i32
    return %c0_i32, %arg0, %c0_i32_0 : i32, i32, i32
  }
  func.func @transform_1(%arg0: i32) -> (i32, i32, i32) {
    %c0_i32 = arith.constant 0 : i32
    %c0_i32_0 = arith.constant 0 : i32
    %c0_i32_1 = arith.constant 0 : i32
    return %c0_i32, %arg0, %c0_i32_0 : i32, i32, i32
  }
  func.func @transform_2(%arg0: i32) -> (i32, i32) {
    %c0_i32 = arith.constant 0 : i32
    %c0_i32_0 = arith.constant 0 : i32
    %c0_i32_1 = arith.constant 0 : i32
    return %c0_i32, %c0_i32_0 : i32, i32
  }
  func.func @transform_3(%arg0: i32) -> (i32, i32, i32) {
    %c0_i32 = arith.constant 0 : i32
    %c0_i32_0 = arith.constant 0 : i32
    %c0_i32_1 = arith.constant 0 : i32
    return %c0_i32, %arg0, %c0_i32_0 : i32, i32, i32
  }
}

</mosaic_0001>

<llo_original>
// kernel: tpu_custom_call.1
$region0: #{tpu_custom_call.1}
  #allocation0 [shape = 'u32[]', space=smem, size = 0x4, offset = 0x4, fixed_abs, tag = 'smem constant byte address 0x4 - core index']
  #allocation1 [shape = 'u32[144,128]{1,0:T(1,128)}', space=vmem, size = 0x12000, scoped, tag = 'internal scratch']
  %s0 = inlined_call_operand.hbm [shape: f32[3,8,32], index: 0, kind: input, shape index: {}]
  %s1 = inlined_call_operand.hbm [shape: f32[3,8,32], index: 1, kind: input, shape index: {}]
  %s2 = inlined_call_operand.hbm [shape: f32[16,10], index: 2, kind: input, shape index: {}]
  %s3 = inlined_call_operand.hbm [shape: f32[6,8,10], index: 3, kind: output, shape index: {}]
  %s4 = sld [smem:[#allocation0]]
  $region34: #{tpu_custom_call.1} parent=0
    _
  %s6 = ssub.s32 1, %s4
  %s7 = scalar_select 0, %s6, %s4
  $region1: #{tpu_custom_call.1} parent=0
    #allocation2 [shape = 'u8[12288]{0}', space=vmem, size = 0x3000, scoped, tag = 'input window, operand 0, single buffered']
    #allocation3 [shape = 's32[1]{0}', space=sflag, size = 0x4, scoped, tag = 'scoped memory for tpu_custom_call.1']
    #allocation4 [shape = 's32[1]{0}', space=sflag, size = 0x4, scoped, tag = 'scoped memory for tpu_custom_call.1']
    #allocation5 [shape = 'u8[12288]{0}', space=vmem, size = 0x3000, scoped, tag = 'input window, operand 1, single buffered']
    #allocation6 [shape = 's32[1]{0}', space=sflag, size = 0x4, scoped, tag = 'scoped memory for tpu_custom_call.1']
    #allocation7 [shape = 'u8[8192]{0}', space=vmem, size = 0x2000, scoped, tag = 'input window, operand 2, single buffered']
    #allocation8 [shape = 'u8[24576]{0}', space=vmem, size = 0x6000, scoped, tag = 'output window, operand 0, single buffered']
    %8 = vsyncpa [#allocation3], 0
    %9 = vsyncpa [#allocation6], 0
    %10 = vsyncpa [#allocation4], 0
    // Predicated region
    $region2: #{tpu_custom_call.1} parent=1 // pred_check
      _
    $region3: #{tpu_custom_call.1} parent=1 // pred_check_branch
      %12 = sbr.rel (0) target = $region5
    $region4: #{tpu_custom_call.1} parent=1 // pred_region
      %s14 = ssub.s32 384, 384
      %15 = vsyncadd [#allocation3], %s14
      %s16 = sshll.u32 [#allocation2], 4
      %s17 = int_to_ptr.vmem [resolvable:$true] %s16
      %22 = dma.hbm_to_vmem [thread:$0]  %s0, 384, %s17, [#allocation3], 128, 128, 8
    $region5: #{tpu_custom_call.1} parent=1 // pred_fallthru
      _
    // Predicated region
    $region6: #{tpu_custom_call.1} parent=1 // pred_check
      _
    $region7: #{tpu_custom_call.1} parent=1 // pred_check_branch
      %24 = sbr.rel (0) target = $region9
    $region8: #{tpu_custom_call.1} parent=1 // pred_region
      %s26 = ssub.s32 384, 384
      %27 = vsyncadd [#allocation6], %s26
      %s28 = sshll.u32 [#allocation5], 4
      %s29 = int_to_ptr.vmem [resolvable:$true] %s28
      %34 = dma.hbm_to_vmem [thread:$0]  %s1, 384, %s29, [#allocation6], 128, 128, 8
    $region9: #{tpu_custom_call.1} parent=1 // pred_fallthru
      _
    // Predicated region
    $region10: #{tpu_custom_call.1} parent=1 // pred_check
      _
    $region11: #{tpu_custom_call.1} parent=1 // pred_check_branch
      %36 = sbr.rel (0) target = $region13
    $region12: #{tpu_custom_call.1} parent=1 // pred_region
      %s38 = ssub.s32 256, 256
      %39 = vsyncadd [#allocation6], %s38
      %s40 = sshll.u32 [#allocation7], 4
      %s41 = int_to_ptr.vmem [resolvable:$true] %s40
      %46 = dma.hbm_to_vmem [thread:$0]  %s2, 256, %s41, [#allocation6], 128, 128, 8
    $region13: #{tpu_custom_call.1} parent=1 // pred_fallthru
      _
    // Predicated region
    $region14: #{tpu_custom_call.1} parent=1 // pred_check
      _
    $region15: #{tpu_custom_call.1} parent=1 // pred_check_branch
      %48 = sbr.rel (0) target = $region17
    $region16: #{tpu_custom_call.1} parent=1 // pred_region
      %49 = dma.done [#allocation3], 384
    $region17: #{tpu_custom_call.1} parent=1 // pred_fallthru
      _
    // Predicated region
    $region18: #{tpu_custom_call.1} parent=1 // pred_check
      _
    $region19: #{tpu_custom_call.1} parent=1 // pred_check_branch
      %51 = sbr.rel (0) target = $region21
    $region20: #{tpu_custom_call.1} parent=1 // pred_region
      %52 = dma.done [#allocation6], 384
    $region21: #{tpu_custom_call.1} parent=1 // pred_fallthru
      _
    // Predicated region
    $region22: #{tpu_custom_call.1} parent=1 // pred_check
      _
    $region23: #{tpu_custom_call.1} parent=1 // pred_check_branch
      %54 = sbr.rel (0) target = $region25
    $region24: #{tpu_custom_call.1} parent=1 // pred_region
      %55 = dma.done [#allocation6], 256
    $region25: #{tpu_custom_call.1} parent=1 // pred_fallthru
      _
    %v56 = vld [vmem:[#allocation2] sm:$0xff]
    %v57 = vld [vmem:[#allocation2 + $0x8] sm:$0xff]
    %v58 = vld [vmem:[#allocation2 + $0x10] sm:$0xff]
    %v59 = vld [vmem:[#allocation5] sm:$0xff]
    %v60 = vld [vmem:[#allocation5 + $0x8] sm:$0xff]
    %v61 = vld [vmem:[#allocation5 + $0x10] sm:$0xff]
    %65 = vrot.lane.b32.xlu0 %v56, 112
    %v66 = vpop.permute.xlu0 %65
    %67 = vrot.lane.b32.xlu0 %v57, 112
    %v68 = vpop.permute.xlu0 %67
    %69 = vrot.lane.b32.xlu0 %v58, 112
    %v70 = vpop.permute.xlu0 %69
    %v74 = vadd.f32 %v56, %v66
    %v75 = vadd.f32 %v57, %v68
    %v76 = vadd.f32 %v58, %v70
    %80 = vrot.lane.b32.xlu0 %v59, 112
    %v81 = vpop.permute.xlu0 %80
    %82 = vrot.lane.b32.xlu0 %v60, 112
    %v83 = vpop.permute.xlu0 %82
    %84 = vrot.lane.b32.xlu0 %v61, 112
    %v85 = vpop.permute.xlu0 %84
    %v89 = vadd.f32 %v59, %v81
    %v90 = vadd.f32 %v60, %v83
    %v91 = vadd.f32 %v61, %v85
    %v92 = vld [vmem:[#allocation7] sm:$0xff]
    %v93 = vld [vmem:[#allocation7 + $0x8] sm:$0xff]
    %vm94 = vcmask 130048
    %v96 = vsel %vm94, %v74, 0
    %98 = vmatprep.subr.mxu0 0.0
    %99 = vmatpush1.msra.mxu0 %v92
    %100 = vmatprep.subr.mxu0 0.0
    %101 = vmatpush1.msra.mxu0 %v93
    %102 = vmatprep.subr.mxu0 0.0
    %103 = vmatpush1.msra.mxu0 0.0
    %104 = vmatprep.subr.mxu0 0.0
    %105 = vmatpush1.msra.mxu0 0.0
    %106 = vmatprep.subr.mxu0 0.0
    %107 = vmatpush1.msra.mxu0 0.0
    %108 = vmatprep.subr.mxu0 0.0
    %109 = vmatpush1.msra.mxu0 0.0
    %110 = vmatprep.subr.mxu0 0.0
    %111 = vmatpush1.msra.mxu0 0.0
    %112 = vmatprep.subr.mxu0 0.0
    %113 = vmatpush1.msra.mxu0 0.0
    %114 = vmatprep.subr.mxu0 0.0
    %115 = vmatpush1.msra.mxu0 0.0
    %116 = vmatprep.subr.mxu0 0.0
    %117 = vmatpush1.msra.mxu0 0.0
    %118 = vmatprep.subr.mxu0 0.0
    %119 = vmatpush1.msra.mxu0 0.0
    %120 = vmatprep.subr.mxu0 0.0
    %121 = vmatpush1.msra.mxu0 0.0
    %122 = vmatprep.subr.mxu0 0.0
    %123 = vmatpush1.msra.mxu0 0.0
    %124 = vmatprep.subr.mxu0 0.0
    %125 = vmatpush1.msra.mxu0 0.0
    %126 = vmatprep.subr.mxu0 0.0
    %127 = vmatpush1.msra.mxu0 0.0
    %128 = vmatprep.subr.mxu0 0.0
    %129 = vmatpush1.msra.mxu0 0.0
    %130 = vmatprep.subr.mxu0 0.0
    %131 = vmatpush1.msra.mxu0 0.0
    %132 = vmatprep.subr.mxu0 0.0
    %133 = vmatpush1.msra.mxu0 0.0
    %134 = vmatprep.subr.mxu0 0.0
    %135 = vmatpush1.msra.mxu0 0.0
    %136 = vmatprep.subr.mxu0 0.0
    %137 = vmatpush1.msra.mxu0 0.0
    %138 = vmatprep.subr.mxu0 0.0
    %139 = vmatpush1.msra.mxu0 0.0
    %140 = vmatprep.subr.mxu0 0.0
    %141 = vmatpush1.msra.mxu0 0.0
    %142 = vmatprep.subr.mxu0 0.0
    %143 = vmatpush1.msra.mxu0 0.0
    %144 = vmatprep.subr.mxu0 0.0
    %145 = vmatpush1.msra.mxu0 0.0
    %146 = vmatprep.subr.mxu0 0.0
    %147 = vmatpush1.msra.mxu0 0.0
    %148 = vmatprep.subr.mxu0 0.0
    %149 = vmatpush1.msra.mxu0 0.0
    %150 = vmatprep.subr.mxu0 0.0
    %151 = vmatpush1.msra.mxu0 0.0
    %152 = vmatprep.subr.mxu0 0.0
    %153 = vmatpush1.msra.mxu0 0.0
    %154 = vmatprep.subr.mxu0 0.0
    %155 = vmatpush1.msra.mxu0 0.0
    %156 = vmatprep.subr.mxu0 0.0
    %157 = vmatpush1.msra.mxu0 0.0
    %158 = vmatprep.subr.mxu0 0.0
    %159 = vmatpush1.msra.mxu0 0.0
    %160 = vmatprep.subr.mxu0 0.0
    %161 = vmatpush1.msra.mxu0 0.0
    %162 = vmatprep.mubr.f32.mxu0 0.0
    %163 = vmatmul.mubr.f32.gmra.mrb[0].mxu0 %v96
    %v164 = vpop.f32.mrb[0].mxu0
    %v165 = vadd.f32 0.0, %v164
    %v166 = vpop.f32.mrb[0].mxu0
    %167 = vdwg.mxu0
    %vm168 = vcmask 80896
    %169 = vst.msk [vmem:[#allocation8] sm:$0xff] %vm168, %v165
    %v171 = vsel %vm94, %v89, 0
    %173 = vmatprep.subr.mxu0 0.0
    %174 = vmatpush1.msra.mxu0 %v92
    %175 = vmatprep.subr.mxu0 0.0
    %176 = vmatpush1.msra.mxu0 %v93
    %177 = vmatprep.subr.mxu0 0.0
    %178 = vmatpush1.msra.mxu0 0.0
    %179 = vmatprep.subr.mxu0 0.0
    %180 = vmatpush1.msra.mxu0 0.0
    %181 = vmatprep.subr.mxu0 0.0
    %182 = vmatpush1.msra.mxu0 0.0
    %183 = vmatprep.subr.mxu0 0.0
    %184 = vmatpush1.msra.mxu0 0.0
    %185 = vmatprep.subr.mxu0 0.0
    %186 = vmatpush1.msra.mxu0 0.0
    %187 = vmatprep.subr.mxu0 0.0
    %188 = vmatpush1.msra.mxu0 0.0
    %189 = vmatprep.subr.mxu0 0.0
    %190 = vmatpush1.msra.mxu0 0.0
    %191 = vmatprep.subr.mxu0 0.0
    %192 = vmatpush1.msra.mxu0 0.0
    %193 = vmatprep.subr.mxu0 0.0
    %194 = vmatpush1.msra.mxu0 0.0
    %195 = vmatprep.subr.mxu0 0.0
    %196 = vmatpush1.msra.mxu0 0.0
    %197 = vmatprep.subr.mxu0 0.0
    %198 = vmatpush1.msra.mxu0 0.0
    %199 = vmatprep.subr.mxu0 0.0
    %200 = vmatpush1.msra.mxu0 0.0
    %201 = vmatprep.subr.mxu0 0.0
    %202 = vmatpush1.msra.mxu0 0.0
    %203 = vmatprep.subr.mxu0 0.0
    %204 = vmatpush1.msra.mxu0 0.0
    %205 = vmatprep.subr.mxu0 0.0
    %206 = vmatpush1.msra.mxu0 0.0
    %207 = vmatprep.subr.mxu0 0.0
    %208 = vmatpush1.msra.mxu0 0.0
    %209 = vmatprep.subr.mxu0 0.0
    %210 = vmatpush1.msra.mxu0 0.0
    %211 = vmatprep.subr.mxu0 0.0
    %212 = vmatpush1.msra.mxu0 0.0
    %213 = vmatprep.subr.mxu0 0.0
    %214 = vmatpush1.msra.mxu0 0.0
    %215 = vmatprep.subr.mxu0 0.0
    %216 = vmatpush1.msra.mxu0 0.0
    %217 = vmatprep.subr.mxu0 0.0
    %218 = vmatpush1.msra.mxu0 0.0
    %219 = vmatprep.subr.mxu0 0.0
    %220 = vmatpush1.msra.mxu0 0.0
    %221 = vmatprep.subr.mxu0 0.0
    %222 = vmatpush1.msra.mxu0 0.0
    %223 = vmatprep.subr.mxu0 0.0
    %224 = vmatpush1.msra.mxu0 0.0
    %225 = vmatprep.subr.mxu0 0.0
    %226 = vmatpush1.msra.mxu0 0.0
    %227 = vmatprep.subr.mxu0 0.0
    %228 = vmatpush1.msra.mxu0 0.0
    %229 = vmatprep.subr.mxu0 0.0
    %230 = vmatpush1.msra.mxu0 0.0
    %231 = vmatprep.subr.mxu0 0.0
    %232 = vmatpush1.msra.mxu0 0.0
    %233 = vmatprep.subr.mxu0 0.0
    %234 = vmatpush1.msra.mxu0 0.0
    %235 = vmatprep.subr.mxu0 0.0
    %236 = vmatpush1.msra.mxu0 0.0
    %237 = vmatprep.mubr.f32.mxu0 0.0
    %238 = vmatmul.mubr.f32.gmra.mrb[0].mxu0 %v171
    %v239 = vpop.f32.mrb[0].mxu0
    %v240 = vadd.f32 0.0, %v239
    %v241 = vpop.f32.mrb[0].mxu0
    %242 = vdwg.mxu0
    %s243 = scalar_lea.vmem [#allocation8], 24
    %244 = vst.msk [vmem:[%s243] sm:$0xff] %vm168, %v240
    %v246 = vsel %vm94, %v75, 0
    %248 = vmatprep.subr.mxu0 0.0
    %249 = vmatpush1.msra.mxu0 %v92
    %250 = vmatprep.subr.mxu0 0.0
    %251 = vmatpush1.msra.mxu0 %v93
    %252 = vmatprep.subr.mxu0 0.0
    %253 = vmatpush1.msra.mxu0 0.0
    %254 = vmatprep.subr.mxu0 0.0
    %255 = vmatpush1.msra.mxu0 0.0
    %256 = vmatprep.subr.mxu0 0.0
    %257 = vmatpush1.msra.mxu0 0.0
    %258 = vmatprep.subr.mxu0 0.0
    %259 = vmatpush1.msra.mxu0 0.0
    %260 = vmatprep.subr.mxu0 0.0
    %261 = vmatpush1.msra.mxu0 0.0
    %262 = vmatprep.subr.mxu0 0.0
    %263 = vmatpush1.msra.mxu0 0.0
    %264 = vmatprep.subr.mxu0 0.0
    %265 = vmatpush1.msra.mxu0 0.0
    %266 = vmatprep.subr.mxu0 0.0
    %267 = vmatpush1.msra.mxu0 0.0
    %268 = vmatprep.subr.mxu0 0.0
    %269 = vmatpush1.msra.mxu0 0.0
    %270 = vmatprep.subr.mxu0 0.0
    %271 = vmatpush1.msra.mxu0 0.0
    %272 = vmatprep.subr.mxu0 0.0
    %273 = vmatpush1.msra.mxu0 0.0
    %274 = vmatprep.subr.mxu0 0.0
    %275 = vmatpush1.msra.mxu0 0.0
    %276 = vmatprep.subr.mxu0 0.0
    %277 = vmatpush1.msra.mxu0 0.0
    %278 = vmatprep.subr.mxu0 0.0
    %279 = vmatpush1.msra.mxu0 0.0
    %280 = vmatprep.subr.mxu0 0.0
    %281 = vmatpush1.msra.mxu0 0.0
    %282 = vmatprep.subr.mxu0 0.0
    %283 = vmatpush1.msra.mxu0 0.0
    %284 = vmatprep.subr.mxu0 0.0
    %285 = vmatpush1.msra.mxu0 0.0
    %286 = vmatprep.subr.mxu0 0.0
    %287 = vmatpush1.msra.mxu0 0.0
    %288 = vmatprep.subr.mxu0 0.0
    %289 = vmatpush1.msra.mxu0 0.0
    %290 = vmatprep.subr.mxu0 0.0
    %291 = vmatpush1.msra.mxu0 0.0
    %292 = vmatprep.subr.mxu0 0.0
    %293 = vmatpush1.msra.mxu0 0.0
    %294 = vmatprep.subr.mxu0 0.0
    %295 = vmatpush1.msra.mxu0 0.0
    %296 = vmatprep.subr.mxu0 0.0
    %297 = vmatpush1.msra.mxu0 0.0
    %298 = vmatprep.subr.mxu0 0.0
    %299 = vmatpush1.msra.mxu0 0.0
    %300 = vmatprep.subr.mxu0 0.0
    %301 = vmatpush1.msra.mxu0 0.0
    %302 = vmatprep.subr.mxu0 0.0
    %303 = vmatpush1.msra.mxu0 0.0
    %304 = vmatprep.subr.mxu0 0.0
    %305 = vmatpush1.msra.mxu0 0.0
    %306 = vmatprep.subr.mxu0 0.0
    %307 = vmatpush1.msra.mxu0 0.0
    %308 = vmatprep.subr.mxu0 0.0
    %309 = vmatpush1.msra.mxu0 0.0
    %310 = vmatprep.subr.mxu0 0.0
    %311 = vmatpush1.msra.mxu0 0.0
    %312 = vmatprep.mubr.f32.mxu0 0.0
    %313 = vmatmul.mubr.f32.gmra.mrb[0].mxu0 %v246
    %v314 = vpop.f32.mrb[0].mxu0
    %v315 = vadd.f32 0.0, %v314
    %v316 = vpop.f32.mrb[0].mxu0
    %317 = vdwg.mxu0
    %s318 = scalar_lea.vmem [#allocation8], 8
    %319 = vst.msk [vmem:[%s318] sm:$0xff] %vm168, %v315
    %v321 = vsel %vm94, %v90, 0
    %323 = vmatprep.subr.mxu0 0.0
    %324 = vmatpush1.msra.mxu0 %v92
    %325 = vmatprep.subr.mxu0 0.0
    %326 = vmatpush1.msra.mxu0 %v93
    %327 = vmatprep.subr.mxu0 0.0
    %328 = vmatpush1.msra.mxu0 0.0
    %329 = vmatprep.subr.mxu0 0.0
    %330 = vmatpush1.msra.mxu0 0.0
    %331 = vmatprep.subr.mxu0 0.0
    %332 = vmatpush1.msra.mxu0 0.0
    %333 = vmatprep.subr.mxu0 0.0
    %334 = vmatpush1.msra.mxu0 0.0
    %335 = vmatprep.subr.mxu0 0.0
    %336 = vmatpush1.msra.mxu0 0.0
    %337 = vmatprep.subr.mxu0 0.0
    %338 = vmatpush1.msra.mxu0 0.0
    %339 = vmatprep.subr.mxu0 0.0
    %340 = vmatpush1.msra.mxu0 0.0
    %341 = vmatprep.subr.mxu0 0.0
    %342 = vmatpush1.msra.mxu0 0.0
    %343 = vmatprep.subr.mxu0 0.0
    %344 = vmatpush1.msra.mxu0 0.0
    %345 = vmatprep.subr.mxu0 0.0
    %346 = vmatpush1.msra.mxu0 0.0
    %347 = vmatprep.subr.mxu0 0.0
    %348 = vmatpush1.msra.mxu0 0.0
    %349 = vmatprep.subr.mxu0 0.0
    %350 = vmatpush1.msra.mxu0 0.0
    %351 = vmatprep.subr.mxu0 0.0
    %352 = vmatpush1.msra.mxu0 0.0
    %353 = vmatprep.subr.mxu0 0.0
    %354 = vmatpush1.msra.mxu0 0.0
    %355 = vmatprep.subr.mxu0 0.0
    %356 = vmatpush1.msra.mxu0 0.0
    %357 = vmatprep.subr.mxu0 0.0
    %358 = vmatpush1.msra.mxu0 0.0
    %359 = vmatprep.subr.mxu0 0.0
    %360 = vmatpush1.msra.mxu0 0.0
    %361 = vmatprep.subr.mxu0 0.0
    %362 = vmatpush1.msra.mxu0 0.0
    %363 = vmatprep.subr.mxu0 0.0
    %364 = vmatpush1.msra.mxu0 0.0
    %365 = vmatprep.subr.mxu0 0.0
    %366 = vmatpush1.msra.mxu0 0.0
    %367 = vmatprep.subr.mxu0 0.0
    %368 = vmatpush1.msra.mxu0 0.0
    %369 = vmatprep.subr.mxu0 0.0
    %370 = vmatpush1.msra.mxu0 0.0
    %371 = vmatprep.subr.mxu0 0.0
    %372 = vmatpush1.msra.mxu0 0.0
    %373 = vmatprep.subr.mxu0 0.0
    %374 = vmatpush1.msra.mxu0 0.0
    %375 = vmatprep.subr.mxu0 0.0
    %376 = vmatpush1.msra.mxu0 0.0
    %377 = vmatprep.subr.mxu0 0.0
    %378 = vmatpush1.msra.mxu0 0.0
    %379 = vmatprep.subr.mxu0 0.0
    %380 = vmatpush1.msra.mxu0 0.0
    %381 = vmatprep.subr.mxu0 0.0
    %382 = vmatpush1.msra.mxu0 0.0
    %383 = vmatprep.subr.mxu0 0.0
    %384 = vmatpush1.msra.mxu0 0.0
    %385 = vmatprep.subr.mxu0 0.0
    %386 = vmatpush1.msra.mxu0 0.0
    %387 = vmatprep.mubr.f32.mxu0 0.0
    %388 = vmatmul.mubr.f32.gmra.mrb[0].mxu0 %v321
    %v389 = vpop.f32.mrb[0].mxu0
    %v390 = vadd.f32 0.0, %v389
    %v391 = vpop.f32.mrb[0].mxu0
    %392 = vdwg.mxu0
    %s393 = scalar_lea.vmem [#allocation8], 32
    %394 = vst.msk [vmem:[%s393] sm:$0xff] %vm168, %v390
    %v396 = vsel %vm94, %v76, 0
    %398 = vmatprep.subr.mxu0 0.0
    %399 = vmatpush1.msra.mxu0 %v92
    %400 = vmatprep.subr.mxu0 0.0
    %401 = vmatpush1.msra.mxu0 %v93
    %402 = vmatprep.subr.mxu0 0.0
    %403 = vmatpush1.msra.mxu0 0.0
    %404 = vmatprep.subr.mxu0 0.0
    %405 = vmatpush1.msra.mxu0 0.0
    %406 = vmatprep.subr.mxu0 0.0
    %407 = vmatpush1.msra.mxu0 0.0
    %408 = vmatprep.subr.mxu0 0.0
    %409 = vmatpush1.msra.mxu0 0.0
    %410 = vmatprep.subr.mxu0 0.0
    %411 = vmatpush1.msra.mxu0 0.0
    %412 = vmatprep.subr.mxu0 0.0
    %413 = vmatpush1.msra.mxu0 0.0
    %414 = vmatprep.subr.mxu0 0.0
    %415 = vmatpush1.msra.mxu0 0.0
    %416 = vmatprep.subr.mxu0 0.0
    %417 = vmatpush1.msra.mxu0 0.0
    %418 = vmatprep.subr.mxu0 0.0
    %419 = vmatpush1.msra.mxu0 0.0
    %420 = vmatprep.subr.mxu0 0.0
    %421 = vmatpush1.msra.mxu0 0.0
    %422 = vmatprep.subr.mxu0 0.0
    %423 = vmatpush1.msra.mxu0 0.0
    %424 = vmatprep.subr.mxu0 0.0
    %425 = vmatpush1.msra.mxu0 0.0
    %426 = vmatprep.subr.mxu0 0.0
    %427 = vmatpush1.msra.mxu0 0.0
    %428 = vmatprep.subr.mxu0 0.0
    %429 = vmatpush1.msra.mxu0 0.0
    %430 = vmatprep.subr.mxu0 0.0
    %431 = vmatpush1.msra.mxu0 0.0
    %432 = vmatprep.subr.mxu0 0.0
    %433 = vmatpush1.msra.mxu0 0.0
    %434 = vmatprep.subr.mxu0 0.0
    %435 = vmatpush1.msra.mxu0 0.0
    %436 = vmatprep.subr.mxu0 0.0
    %437 = vmatpush1.msra.mxu0 0.0
    %438 = vmatprep.subr.mxu0 0.0
    %439 = vmatpush1.msra.mxu0 0.0
    %440 = vmatprep.subr.mxu0 0.0
    %441 = vmatpush1.msra.mxu0 0.0
    %442 = vmatprep.subr.mxu0 0.0
    %443 = vmatpush1.msra.mxu0 0.0
    %444 = vmatprep.subr.mxu0 0.0
    %445 = vmatpush1.msra.mxu0 0.0
    %446 = vmatprep.subr.mxu0 0.0
    %447 = vmatpush1.msra.mxu0 0.0
    %448 = vmatprep.subr.mxu0 0.0
    %449 = vmatpush1.msra.mxu0 0.0
    %450 = vmatprep.subr.mxu0 0.0
    %451 = vmatpush1.msra.mxu0 0.0
    %452 = vmatprep.subr.mxu0 0.0
    %453 = vmatpush1.msra.mxu0 0.0
    %454 = vmatprep.subr.mxu0 0.0
    %455 = vmatpush1.msra.mxu0 0.0
    %456 = vmatprep.subr.mxu0 0.0
    %457 = vmatpush1.msra.mxu0 0.0
    %458 = vmatprep.subr.mxu0 0.0
    %459 = vmatpush1.msra.mxu0 0.0
    %460 = vmatprep.subr.mxu0 0.0
    %461 = vmatpush1.msra.mxu0 0.0
    %462 = vmatprep.mubr.f32.mxu0 0.0
    %463 = vmatmul.mubr.f32.gmra.mrb[0].mxu0 %v396
    %v464 = vpop.f32.mrb[0].mxu0
    %v465 = vadd.f32 0.0, %v464
    %v466 = vpop.f32.mrb[0].mxu0
    %467 = vdwg.mxu0
    %s468 = scalar_lea.vmem [#allocation8], 16
    %469 = vst.msk [vmem:[%s468] sm:$0xff] %vm168, %v465
    %v471 = vsel %vm94, %v91, 0
    %473 = vmatprep.subr.mxu0 0.0
    %474 = vmatpush1.msra.mxu0 %v92
    %475 = vmatprep.subr.mxu0 0.0
    %476 = vmatpush1.msra.mxu0 %v93
    %477 = vmatprep.subr.mxu0 0.0
    %478 = vmatpush1.msra.mxu0 0.0
    %479 = vmatprep.subr.mxu0 0.0
    %480 = vmatpush1.msra.mxu0 0.0
    %481 = vmatprep.subr.mxu0 0.0
    %482 = vmatpush1.msra.mxu0 0.0
    %483 = vmatprep.subr.mxu0 0.0
    %484 = vmatpush1.msra.mxu0 0.0
    %485 = vmatprep.subr.mxu0 0.0
    %486 = vmatpush1.msra.mxu0 0.0
    %487 = vmatprep.subr.mxu0 0.0
    %488 = vmatpush1.msra.mxu0 0.0
    %489 = vmatprep.subr.mxu0 0.0
    %490 = vmatpush1.msra.mxu0 0.0
    %491 = vmatprep.subr.mxu0 0.0
    %492 = vmatpush1.msra.mxu0 0.0
    %493 = vmatprep.subr.mxu0 0.0
    %494 = vmatpush1.msra.mxu0 0.0
    %495 = vmatprep.subr.mxu0 0.0
    %496 = vmatpush1.msra.mxu0 0.0
    %497 = vmatprep.subr.mxu0 0.0
    %498 = vmatpush1.msra.mxu0 0.0
    %499 = vmatprep.subr.mxu0 0.0
    %500 = vmatpush1.msra.mxu0 0.0
    %501 = vmatprep.subr.mxu0 0.0
    %502 = vmatpush1.msra.mxu0 0.0
    %503 = vmatprep.subr.mxu0 0.0
    %504 = vmatpush1.msra.mxu0 0.0
    %505 = vmatprep.subr.mxu0 0.0
    %506 = vmatpush1.msra.mxu0 0.0
    %507 = vmatprep.subr.mxu0 0.0
    %508 = vmatpush1.msra.mxu0 0.0
    %509 = vmatprep.subr.mxu0 0.0
    %510 = vmatpush1.msra.mxu0 0.0
    %511 = vmatprep.subr.mxu0 0.0
    %512 = vmatpush1.msra.mxu0 0.0
    %513 = vmatprep.subr.mxu0 0.0
    %514 = vmatpush1.msra.mxu0 0.0
    %515 = vmatprep.subr.mxu0 0.0
    %516 = vmatpush1.msra.mxu0 0.0
    %517 = vmatprep.subr.mxu0 0.0
    %518 = vmatpush1.msra.mxu0 0.0
    %519 = vmatprep.subr.mxu0 0.0
    %520 = vmatpush1.msra.mxu0 0.0
    %521 = vmatprep.subr.mxu0 0.0
    %522 = vmatpush1.msra.mxu0 0.0
    %523 = vmatprep.subr.mxu0 0.0
    %524 = vmatpush1.msra.mxu0 0.0
    %525 = vmatprep.subr.mxu0 0.0
    %526 = vmatpush1.msra.mxu0 0.0
    %527 = vmatprep.subr.mxu0 0.0
    %528 = vmatpush1.msra.mxu0 0.0
    %529 = vmatprep.subr.mxu0 0.0
    %530 = vmatpush1.msra.mxu0 0.0
    %531 = vmatprep.subr.mxu0 0.0
    %532 = vmatpush1.msra.mxu0 0.0
    %533 = vmatprep.subr.mxu0 0.0
    %534 = vmatpush1.msra.mxu0 0.0
    %535 = vmatprep.subr.mxu0 0.0
    %536 = vmatpush1.msra.mxu0 0.0
    %537 = vmatprep.mubr.f32.mxu0 0.0
    %538 = vmatmul.mubr.f32.gmra.mrb[0].mxu0 %v471
    %v539 = vpop.f32.mrb[0].mxu0
    %v540 = vadd.f32 0.0, %v539
    %v541 = vpop.f32.mrb[0].mxu0
    %542 = vdwg.mxu0
    %s543 = scalar_lea.vmem [#allocation8], 40
    %544 = vst.msk [vmem:[%s543] sm:$0xff] %vm168, %v540
    // Predicated region
    $region26: #{tpu_custom_call.1} parent=1 // pred_check
      _
    $region27: #{tpu_custom_call.1} parent=1 // pred_check_branch
      %546 = sbr.rel (0) target = $region29
    $region28: #{tpu_custom_call.1} parent=1 // pred_region
      %s548 = ssub.s32 768, 768
      %549 = vsyncadd [#allocation4], %s548
      %s550 = sshll.u32 [#allocation8], 4
      %s551 = int_to_ptr.vmem [resolvable:$true] %s550
      %556 = dma.vmem_to_hbm [thread:$0]  %s551, 768, %s3, [#allocation4], 128, 128, 8
    $region29: #{tpu_custom_call.1} parent=1 // pred_fallthru
      _
    // Predicated region
    $region30: #{tpu_custom_call.1} parent=1 // pred_check
      _
    $region31: #{tpu_custom_call.1} parent=1 // pred_check_branch
      %558 = sbr.rel (0) target = $region33
    $region32: #{tpu_custom_call.1} parent=1 // pred_region
      %559 = dma.done [#allocation4], 768
    $region33: #{tpu_custom_call.1} parent=1 // pred_fallthru
      _
    %560 = vsyncpa [#allocation3], 1
    %561 = vsyncpa [#allocation6], 1
    %562 = vsyncpa [#allocation4], 1

</llo_original>
